<compile_context>
chip_gen: v7x
topology: tpu7x:2x2x1
jax: 0.10.0
libtpu: 0.0.40
codegen_flags: <defaults>
</compile_context>

<pallas_src>
import functools

import numpy as np

import jax
import jax.numpy as jnp
from jax import lax
from jax.experimental import pallas as pl
from jax.experimental.pallas import tpu as pltpu


def _partial_gram_kernel(d_ref, out_ref, *, tile_n, n_rows, k_inner,
                         needs_row_mask):
    """Accumulate a partial Gram matrix of the rows owned by this p-slice."""
    k = pl.program_id(1)

    @pl.when(k == 0)
    def _init():
        out_ref[...] = jnp.zeros_like(out_ref)

    def _accumulate(tile):
        # Contract over the row axis of both operands: this is the MXU's
        # native transposed-lhs matmul (no explicit transpose of the tile),
        # accumulated in f32.
        out_ref[...] += lax.dot_general(
            tile, tile,
            dimension_numbers=(((0,), (0,)), ((), ())),
            preferred_element_type=jnp.float32,
        )

    if needs_row_mask:
        p = pl.program_id(0)
        # Intended (unclamped) first global row of this tile.
        row0 = (p * k_inner + k) * tile_n
        in_bounds = row0 + tile_n <= n_rows

        # Steady state: fully in-bounds tile, no per-element masking work.
        @pl.when(in_bounds)
        def _steady():
            _accumulate(d_ref[...])

        # Boundary tiles only: ragged last tile (zero rows >= n_rows) and
        # clamped fully-out-of-range tiles (zero everything).
        @pl.when(row0 + tile_n > n_rows)
        def _boundary():
            tile = d_ref[...]
            rid = lax.broadcasted_iota(jnp.int32, tile.shape, 0) + row0
            _accumulate(jnp.where(rid < n_rows, tile, jnp.zeros_like(tile)))
    else:
        _accumulate(d_ref[...])


def _build_s_mask(m, dim, n_clusters):
    """Static S mask (ones with zeroed dim x dim diagonal blocks)."""
    s = np.ones((m, m), np.float32)
    for i in range(n_clusters):
        s[i * dim:(i + 1) * dim, i * dim:(i + 1) * dim] = 0.0
    return s


def d_constraint2(d, dim, n_clusters, *, tile_n=None, n_split=2):
    """Pallas implementation of D_constraint2.forward(d, dim, n_clusters)."""
    assert d.ndim == 2, "d must be (N, M)"
    n, m = d.shape
    itemsize = jnp.dtype(d.dtype).itemsize
    row_bytes = m * itemsize

    # ---------------- VMEM budgeting --------------------------------------
    vmem_cap = 48 << 20            # conservative cap (v7x physical VMEM = 64 MiB)
    out_bytes = 2 * m * m * 4      # resident f32 partial-Gram block (x2 buffers)
    if out_bytes + (2 << 20) > vmem_cap:
        # TODO(synk): for very large M, tile the Gram into (M-block, M-block)
        # output tiles over symmetric upper-triangular block pairs instead of
        # one resident (M, M) accumulator.
        raise NotImplementedError(
            f"M={m}: Gram accumulator does not fit the VMEM budget")
    input_budget = min(24 << 20, vmem_cap - out_bytes)

    # ---------------- row-tile sizing: ~4 MiB streamed per grid step ------
    if tile_n is None:
        tn = max((4 << 20) // row_bytes, 512)
        tn = min(tn, input_budget // (2 * row_bytes))
        tn = max(8, (tn // 8) * 8)
    else:
        tn = int(tile_n)
    if n <= tn:
        tn = n                      # single full-extent tile

    num_tiles = pl.cdiv(n, tn)
    p_split = max(1, min(int(n_split), num_tiles))
    k_inner = pl.cdiv(num_tiles, p_split)
    covered_rows = p_split * k_inner * tn
    needs_row_mask = covered_rows != n
    last_tile = num_tiles - 1

    # Input block index map: clamp tiles that would fall entirely past N
    # (only possible when p_split does not divide num_tiles); their
    # contribution is zeroed by the row mask inside the kernel.
    if p_split * k_inner == num_tiles:
        in_index_map = lambda p, k: (p * k_inner + k, 0)
    else:
        in_index_map = lambda p, k: (jnp.minimum(p * k_inner + k, last_tile), 0)

    vmem_limit = int(1.25 * (2 * tn * row_bytes + out_bytes))
    vmem_limit = max(8 << 20, min(vmem_limit, vmem_cap))

    kernel = functools.partial(
        _partial_gram_kernel,
        tile_n=tn, n_rows=n, k_inner=k_inner, needs_row_mask=needs_row_mask)

    partials = pl.pallas_call(
        kernel,
        out_shape=jax.ShapeDtypeStruct((p_split, m, m), jnp.float32),
        grid_spec=pltpu.PrefetchScalarGridSpec(
            num_scalar_prefetch=0,
            grid=(p_split, k_inner),
            in_specs=[pl.BlockSpec((tn, m), in_index_map)],
            out_specs=pl.BlockSpec((None, m, m), lambda p, k: (p, 0, 0)),
        ),
        compiler_params=pltpu.CompilerParams(
            dimension_semantics=("parallel", "arbitrary"),
            vmem_limit_bytes=vmem_limit,
        ),
        cost_estimate=pl.CostEstimate(
            flops=2 * n * m * m,
            bytes_accessed=n * m * itemsize + p_split * m * m * 4,
            transcendentals=0,
        ),
    )(d)

    # Tiny epilogue in plain JAX: combine per-core partial Grams, apply the
    # static block-diagonal mask, Frobenius norm, 0.001 scale.
    g = jnp.sum(partials, axis=0)
    s_mask = jnp.asarray(_build_s_mask(m, dim, n_clusters))
    masked = g * s_mask
    return 0.001 * jnp.sqrt(jnp.sum(masked * masked))


def d_constraint2_ref(d, dim, n_clusters):
    """Pure-JAX reference for sanity checking."""
    m = d.shape[1]
    s = jnp.ones((m, m), jnp.float32)
    zero = jnp.zeros((dim, dim), jnp.float32)
    for i in range(n_clusters):
        s = s.at[i * dim:(i + 1) * dim, i * dim:(i + 1) * dim].set(zero)
    df = d.astype(jnp.float32)
    g = jnp.dot(df.T, df)
    return 0.001 * jnp.sqrt(jnp.sum((g * s) ** 2))


if __name__ == "__main__":
    # Small shapes consistent with the module: d has M = n_clusters * dim columns.
    n_clusters = 4
    dim = 8
    n_rows = 64                        # number of samples / feature rows
    m_cols = n_clusters * dim          # 32

    key = jax.random.PRNGKey(0)
    d = jax.random.normal(key, (n_rows, m_cols), dtype=jnp.float32)

    loss = jax.block_until_ready(d_constraint2(d, dim, n_clusters))
    ref = d_constraint2_ref(d, dim, n_clusters)
    assert jnp.allclose(loss, ref, rtol=1e-5, atol=1e-6), (loss, ref)

    # Exercise the multi-tile path: 2-way parallel split, ragged last tile and
    # clamped out-of-range tile (p_split does not divide the tile count).
    d2 = jax.random.normal(jax.random.PRNGKey(1), (72, m_cols), dtype=jnp.float32)
    loss2 = jax.block_until_ready(d_constraint2(d2, dim, n_clusters, tile_n=16))
    ref2 = d_constraint2_ref(d2, dim, n_clusters)
    assert jnp.allclose(loss2, ref2, rtol=1e-5, atol=1e-6), (loss2, ref2)

    print("KERNEL_OK")
</pallas_src>

<mosaic_0001>
module attributes {stable_mosaic.version = 11 : i64} {
  func.func @_partial_gram_kernel(%arg0: i32, %arg1: i32, %arg2: memref<64x32xf32, #tpu.memory_space<vmem>>, %arg3: memref<1x32x32xf32, #tpu.memory_space<vmem>>) attributes {dimension_semantics = [#tpu.dimension_semantics<parallel>, #tpu.dimension_semantics<arbitrary>], iteration_bounds = array<i64: 1, 1>, scalar_prefetch = 0 : i64, scratch_operands = 0 : i64, tpu.core_type = #tpu.core_type<tc>, window_params = [{transform_indices = @transform_0, window_bounds = array<i64: 64, 32>}, {transform_indices = @transform_1, window_bounds = array<i64: 1, 32, 32>}]} {
    %c0_i32 = arith.constant 0 : i32
    %0 = arith.cmpi eq, %arg1, %c0_i32 : i32
    %1 = arith.extui %0 : i1 to i32
    %c0_i32_0 = arith.constant 0 : i32
    %2 = arith.cmpi ne, %1, %c0_i32_0 : i32
    scf.if %2 {
      %cst_8 = arith.constant 0.000000e+00 : f32
      %11 = vector.broadcast %cst_8 : f32 to vector<32x32xf32>
      %c0_9 = arith.constant 0 : index
      %c0_10 = arith.constant 0 : index
      %c0_11 = arith.constant 0 : index
      %12 = vector.load %arg3[%c0_9, %c0_10, %c0_11] : memref<1x32x32xf32, #tpu.memory_space<vmem>>, vector<1x32x32xf32>
      %13 = vector.shape_cast %12 : vector<1x32x32xf32> to vector<32x32xf32>
      %14 = vector.shape_cast %11 : vector<32x32xf32> to vector<1x32x32xf32>
      tpu.vector_store %arg3[%c0_9, %c0_10, %c0_11], %14 {strides = array<i32>} : memref<1x32x32xf32, #tpu.memory_space<vmem>>, vector<1x32x32xf32>,
    } else {
    }
    %c0 = arith.constant 0 : index
    %c0_1 = arith.constant 0 : index
    %3 = vector.load %arg2[%c0, %c0_1] : memref<64x32xf32, #tpu.memory_space<vmem>>, vector<64x32xf32>
    %c0_2 = arith.constant 0 : index
    %c0_3 = arith.constant 0 : index
    %c0_4 = arith.constant 0 : index
    %4 = vector.load %arg3[%c0_2, %c0_3, %c0_4] : memref<1x32x32xf32, #tpu.memory_space<vmem>>, vector<1x32x32xf32>
    %5 = vector.shape_cast %4 : vector<1x32x32xf32> to vector<32x32xf32>
    %cst = arith.constant dense<0.000000e+00> : vector<32x32xf32>
    %6 = tpu.matmul %3, %3, %cst {dimension_numbers = #tpu.dot_dimension_numbers<[0], [0], [1], [1], [0, 1, 1, 1], [], []>} : vector<64x32xf32>, vector<64x32xf32>, vector<32x32xf32> -> vector<32x32xf32>
    %7 = arith.addf %5, %6 : vector<32x32xf32>
    %c0_5 = arith.constant 0 : index
    %c0_6 = arith.constant 0 : index
    %c0_7 = arith.constant 0 : index
    %8 = vector.load %arg3[%c0_5, %c0_6, %c0_7] : memref<1x32x32xf32, #tpu.memory_space<vmem>>, vector<1x32x32xf32>
    %9 = vector.shape_cast %8 : vector<1x32x32xf32> to vector<32x32xf32>
    %10 = vector.shape_cast %7 : vector<32x32xf32> to vector<1x32x32xf32>
    tpu.vector_store %arg3[%c0_5, %c0_6, %c0_7], %10 {strides = array<i32>} : memref<1x32x32xf32, #tpu.memory_space<vmem>>, vector<1x32x32xf32>,
    return
  }
  func.func @transform_0(%arg0: i32, %arg1: i32) -> (i32, i32) {
    %c1_i32 = arith.constant 1 : i32
    %0 = arith.muli %arg0, %c1_i32 : i32
    %1 = arith.addi %0, %arg1 : i32
    %c0_i32 = arith.constant 0 : i32
    %c0_i32_0 = arith.constant 0 : i32
    return %1, %c0_i32 : i32, i32
  }
  func.func @transform_1(%arg0: i32, %arg1: i32) -> (i32, i32, i32) {
    %c0_i32 = arith.constant 0 : i32
    %c0_i32_0 = arith.constant 0 : i32
    %c0_i32_1 = arith.constant 0 : i32
    return %arg0, %c0_i32, %c0_i32_0 : i32, i32, i32
  }
}

</mosaic_0001>

<llo_original>
// kernel: tpu_custom_call.1
$region0: #{tpu_custom_call.1}
  #allocation0 [shape = 'u32[]', space=smem, size = 0x4, offset = 0x4, fixed_abs, tag = 'smem constant byte address 0x4 - core index']
  #allocation1 [shape = 'u32[144,128]{1,0:T(1,128)}', space=vmem, size = 0x12000, scoped, tag = 'internal scratch']
  %s0 = inlined_call_operand.vmem [shape: f32[64,32], index: 0, kind: input, shape index: {}]
  %s1 = inlined_call_operand.hbm [shape: f32[1,32,32], index: 1, kind: output, shape index: {}]
  %s2 = sld [smem:[#allocation0]]
  $region18: #{tpu_custom_call.1} parent=0
    _
  %s4 = ssub.s32 1, %s2
  %s5 = scalar_select 0, %s4, %s2
  $region1: #{tpu_custom_call.1} parent=0
    #allocation2 [shape = 'u8[16384]{0}', space=vmem, size = 0x4000, scoped, tag = 'output window, operand 0, single buffered']
    #allocation3 [shape = 's32[1]{0}', space=sflag, size = 0x4, scoped, tag = 'scoped memory for tpu_custom_call.1']
    %6 = vsyncpa [#allocation3], 0
    // Predicated region
    $region2: #{tpu_custom_call.1} parent=1 // pred_check
      _
    $region3: #{tpu_custom_call.1} parent=1 // pred_check_branch
      %8 = sbr.rel (0) target = $region5
    $region4: #{tpu_custom_call.1} parent=1 // pred_region
      %s9 = sadd.s32 0, 0
      %s10 = smul.u32 8, %s9
      %p11 = scmp.lt.s32.totalorder %s10, 7
      %s12 = scalar_select %p11, %s10, 7
      %s13 = smul.addr %s12, 8
      %s14 = scalar_lea.vmem %s0, %s13
      %s15 = sadd.s32 0, 0
      %s16 = smul.u32 8, %s15
    $region5: #{tpu_custom_call.1} parent=1 // pred_fallthru
      _
    %s17 = sadd.s32 0, 0
    %s18 = smul.u32 8, %s17
    %p19 = scmp.lt.s32.totalorder %s18, 7
    %s20 = scalar_select %p19, %s18, 7
    %s21 = smul.addr %s20, 8
    %s22 = scalar_lea.vmem %s0, %s21
    %s23 = sadd.s32 0, 0
    %s24 = smul.u32 8, %s23
    %p25 = scmp.lt.s32.totalorder %s24, 7
    %s26 = scalar_select %p25, %s24, 7
    %s27 = smul.addr %s26, 8
    %s28 = scalar_lea.vmem %s0, %s27
    %s29 = sadd.s32 0, 0
    %s30 = smul.u32 8, %s29
    %p31 = scmp.eq.s32.totalorder 0, 0
    // Predicated region
    $region6: #{tpu_custom_call.1} parent=1 // pred_check
      %p32 = pneg %p31
    $region7: #{tpu_custom_call.1} parent=1 // pred_check_branch
      %34 = sbr.rel (%p32) target = $region9
    $region8: #{tpu_custom_call.1} parent=1 // pred_region
      %vm35 = vcmask 261120
      %36 = vst.msk [vmem:[#allocation2] sm:$0xff] %vm35, 0.0
      %37 = vst.msk [vmem:[#allocation2 + $0x8] sm:$0xff] %vm35, 0.0
      %38 = vst.msk [vmem:[#allocation2 + $0x10] sm:$0xff] %vm35, 0.0
      %39 = vst.msk [vmem:[#allocation2 + $0x18] sm:$0xff] %vm35, 0.0
    $region9: #{tpu_custom_call.1} parent=1 // pred_fallthru
      _
    %v40 = vld [vmem:[%s28] sm:$0xff]
    %v41 = vld [vmem:[%s28 + $0x8] sm:$0xff]
    %v42 = vld [vmem:[%s28 + $0x10] sm:$0xff]
    %v43 = vld [vmem:[%s28 + $0x18] sm:$0xff]
    %v44 = vld [vmem:[%s28 + $0x20] sm:$0xff]
    %v45 = vld [vmem:[%s28 + $0x28] sm:$0xff]
    %v46 = vld [vmem:[%s28 + $0x30] sm:$0xff]
    %v47 = vld [vmem:[%s28 + $0x38] sm:$0xff]
    %v48 = vld [vmem:[#allocation2] sm:$0xff]
    %v49 = vld [vmem:[#allocation2 + $0x8] sm:$0xff]
    %v50 = vld [vmem:[#allocation2 + $0x10] sm:$0xff]
    %v51 = vld [vmem:[#allocation2 + $0x18] sm:$0xff]
    %52 = vxpose.xlu0.b32.start [1/16] %v40, 128
    %53 = vxpose.xlu0.b32.cont [2/16] %v41, 128
    %54 = vxpose.xlu0.b32.cont [3/16] %v42, 128
    %55 = vxpose.xlu0.b32.cont [4/16] %v43, 128
    %56 = vxpose.xlu0.b32.cont [5/16] %v44, 128
    %57 = vxpose.xlu0.b32.cont [6/16] %v45, 128
    %58 = vxpose.xlu0.b32.cont [7/16] %v46, 128
    %59 = vxpose.xlu0.b32.cont [8/16] %v47, 128
    %60 = vxpose.xlu0.b32.cont [9/16] 0.0, 128
    %61 = vxpose.xlu0.b32.cont [10/16] 0.0, 128
    %62 = vxpose.xlu0.b32.cont [11/16] 0.0, 128
    %63 = vxpose.xlu0.b32.cont [12/16] 0.0, 128
    %64 = vxpose.xlu0.b32.cont [13/16] 0.0, 128
    %65 = vxpose.xlu0.b32.cont [14/16] 0.0, 128
    %66 = vxpose.xlu0.b32.cont [15/16] 0.0, 128
    %67 = vxpose.xlu0.b32.end [16/16] 0.0, 128
    %v68 = vpop.trf.xlu0
    %v69 = vpop.trf.xlu0
    %v70 = vpop.trf.xlu0
    %v71 = vpop.trf.xlu0
    %v72 = vpop.trf.xlu0
    %v73 = vpop.trf.xlu0
    %v74 = vpop.trf.xlu0
    %v75 = vpop.trf.xlu0
    %v76 = vpop.trf.xlu0
    %v77 = vpop.trf.xlu0
    %v78 = vpop.trf.xlu0
    %v79 = vpop.trf.xlu0
    %v80 = vpop.trf.xlu0
    %v81 = vpop.trf.xlu0
    %v82 = vpop.trf.xlu0
    %v83 = vpop.trf.xlu0
    %vm84 = vcmask 523264
    %v86 = vsel %vm84, %v68, 0
    %v89 = vsel %vm84, %v69, 0
    %v92 = vsel %vm84, %v70, 0
    %v95 = vsel %vm84, %v71, 0
    %97 = vmatprep.subr.mxu0 0.0
    %98 = vmatpush1.msra.mxu0 %v40
    %99 = vmatprep.subr.mxu0 0.0
    %100 = vmatpush1.msra.mxu0 %v41
    %101 = vmatprep.subr.mxu0 0.0
    %102 = vmatpush1.msra.mxu0 %v42
    %103 = vmatprep.subr.mxu0 0.0
    %104 = vmatpush1.msra.mxu0 %v43
    %105 = vmatprep.subr.mxu0 0.0
    %106 = vmatpush1.msra.mxu0 %v44
    %107 = vmatprep.subr.mxu0 0.0
    %108 = vmatpush1.msra.mxu0 %v45
    %109 = vmatprep.subr.mxu0 0.0
    %110 = vmatpush1.msra.mxu0 %v46
    %111 = vmatprep.subr.mxu0 0.0
    %112 = vmatpush1.msra.mxu0 %v47
    %113 = vmatprep.subr.mxu0 0.0
    %114 = vmatpush1.msra.mxu0 0.0
    %115 = vmatprep.subr.mxu0 0.0
    %116 = vmatpush1.msra.mxu0 0.0
    %117 = vmatprep.subr.mxu0 0.0
    %118 = vmatpush1.msra.mxu0 0.0
    %119 = vmatprep.subr.mxu0 0.0
    %120 = vmatpush1.msra.mxu0 0.0
    %121 = vmatprep.subr.mxu0 0.0
    %122 = vmatpush1.msra.mxu0 0.0
    %123 = vmatprep.subr.mxu0 0.0
    %124 = vmatpush1.msra.mxu0 0.0
    %125 = vmatprep.subr.mxu0 0.0
    %126 = vmatpush1.msra.mxu0 0.0
    %127 = vmatprep.subr.mxu0 0.0
    %128 = vmatpush1.msra.mxu0 0.0
    %129 = vmatprep.subr.mxu0 0.0
    %130 = vmatpush1.msra.mxu0 0.0
    %131 = vmatprep.subr.mxu0 0.0
    %132 = vmatpush1.msra.mxu0 0.0
    %133 = vmatprep.subr.mxu0 0.0
    %134 = vmatpush1.msra.mxu0 0.0
    %135 = vmatprep.subr.mxu0 0.0
    %136 = vmatpush1.msra.mxu0 0.0
    %137 = vmatprep.subr.mxu0 0.0
    %138 = vmatpush1.msra.mxu0 0.0
    %139 = vmatprep.subr.mxu0 0.0
    %140 = vmatpush1.msra.mxu0 0.0
    %141 = vmatprep.subr.mxu0 0.0
    %142 = vmatpush1.msra.mxu0 0.0
    %143 = vmatprep.subr.mxu0 0.0
    %144 = vmatpush1.msra.mxu0 0.0
    %145 = vmatprep.subr.mxu0 0.0
    %146 = vmatpush1.msra.mxu0 0.0
    %147 = vmatprep.subr.mxu0 0.0
    %148 = vmatpush1.msra.mxu0 0.0
    %149 = vmatprep.subr.mxu0 0.0
    %150 = vmatpush1.msra.mxu0 0.0
    %151 = vmatprep.subr.mxu0 0.0
    %152 = vmatpush1.msra.mxu0 0.0
    %153 = vmatprep.subr.mxu0 0.0
    %154 = vmatpush1.msra.mxu0 0.0
    %155 = vmatprep.subr.mxu0 0.0
    %156 = vmatpush1.msra.mxu0 0.0
    %157 = vmatprep.subr.mxu0 0.0
    %158 = vmatpush1.msra.mxu0 0.0
    %159 = vmatprep.subr.mxu0 0.0
    %160 = vmatpush1.msra.mxu0 0.0
    %161 = vmatprep.mubr.f32.mxu0 0.0
    %162 = vmatmul.mubr.f32.gmra.mrb[0].mxu0 %v86
    %v163 = vpop.f32.mrb[0].mxu0
    %v164 = vadd.f32 0.0, %v163
    %v165 = vpop.f32.mrb[0].mxu0
    %166 = vmatprep.mubr.f32.mxu0 0.0
    %167 = vmatmul.mubr.f32.gmra.mrb[0].mxu0 %v89
    %v168 = vpop.f32.mrb[0].mxu0
    %v169 = vadd.f32 0.0, %v168
    %v170 = vpop.f32.mrb[0].mxu0
    %171 = vmatprep.mubr.f32.mxu0 0.0
    %172 = vmatmul.mubr.f32.gmra.mrb[0].mxu0 %v92
    %v173 = vpop.f32.mrb[0].mxu0
    %v174 = vadd.f32 0.0, %v173
    %v175 = vpop.f32.mrb[0].mxu0
    %176 = vmatprep.mubr.f32.mxu0 0.0
    %177 = vmatmul.mubr.f32.gmra.mrb[0].mxu0 %v95
    %v178 = vpop.f32.mrb[0].mxu0
    %v179 = vadd.f32 0.0, %v178
    %v180 = vpop.f32.mrb[0].mxu0
    %181 = vdwg.mxu0
    %v182 = vadd.f32 %v48, %v164
    %v183 = vadd.f32 %v49, %v169
    %v184 = vadd.f32 %v50, %v174
    %v185 = vadd.f32 %v51, %v179
    %vm186 = vcmask 261120
    %187 = vst.msk [vmem:[#allocation2] sm:$0xff] %vm186, %v182
    %188 = vst.msk [vmem:[#allocation2 + $0x8] sm:$0xff] %vm186, %v183
    %189 = vst.msk [vmem:[#allocation2 + $0x10] sm:$0xff] %vm186, %v184
    %190 = vst.msk [vmem:[#allocation2 + $0x18] sm:$0xff] %vm186, %v185
    // Predicated region
    $region10: #{tpu_custom_call.1} parent=1 // pred_check
      _
    $region11: #{tpu_custom_call.1} parent=1 // pred_check_branch
      %192 = sbr.rel (0) target = $region13
    $region12: #{tpu_custom_call.1} parent=1 // pred_region
      %s194 = ssub.s32 512, 512
      %195 = vsyncadd [#allocation3], %s194
      %s196 = sshll.u32 [#allocation2], 4
      %s197 = int_to_ptr.vmem [resolvable:$true] %s196
      %202 = dma.vmem_to_hbm [thread:$0]  %s197, 512, %s1, [#allocation3], 128, 128, 8
    $region13: #{tpu_custom_call.1} parent=1 // pred_fallthru
      _
    // Predicated region
    $region14: #{tpu_custom_call.1} parent=1 // pred_check
      _
    $region15: #{tpu_custom_call.1} parent=1 // pred_check_branch
      %204 = sbr.rel (0) target = $region17
    $region16: #{tpu_custom_call.1} parent=1 // pred_region
      %205 = dma.done [#allocation3], 512
    $region17: #{tpu_custom_call.1} parent=1 // pred_fallthru
      _
    %206 = vsyncpa [#allocation3], 1

</llo_original>
